<compile_context>
chip_gen: v6e
topology: v6e:2x2x1
jax: 0.10.0
libtpu: 0.0.40
codegen_flags: <defaults>
</compile_context>

<pallas_src>
import functools
import math

import jax
import jax.numpy as jnp
from jax import lax
from jax.experimental import pallas as pl
from jax.experimental.pallas import tpu as pltpu

_LANES = 128
_MIB = 1024 * 1024
_PACKED_W1_BYTES_LIMIT = 4 * _MIB   # guard: never kron-pack large weights


def _round_up(x, m):
    return ((x + m - 1) // m) * m


def _sublanes(dtype):
    # rows per vreg for this dtype: f32 -> 8, bf16 -> 16, int8/fp8 -> 32
    return max(8, 32 // jnp.dtype(dtype).itemsize)


def _vmem_array_bytes(rows, cols, dtype):
    # Lane-/sublane-padded VMEM footprint of a 2-D array.
    it = jnp.dtype(dtype).itemsize
    return _round_up(max(rows, 1), _sublanes(dtype)) * _round_up(cols, _LANES) * it


def _vmem_capacity_bytes():
    try:
        return int(pltpu.get_tpu_info().vmem_capacity_bytes)
    except Exception:
        return 64 * _MIB   # conservative fallback (v7x: 64 MiB per TensorCore)


def _choose_pack(m_total, in_dim, out_dim, w_itemsize):
    """Tokens folded per packed row so stores are >=128 lanes wide (unmasked vst).

    Returns 1 (no packing) when out_dim is already lane-sized, when the
    block-diagonal weight would get too large, or as needed so that the pack
    always divides the token count exactly (no wrapper pad/slice).
    """
    if out_dim % _LANES == 0 or _LANES % out_dim != 0:
        return 1
    base = _LANES // out_dim

    def packed_w1_bytes(p):
        return p * p * in_dim * out_dim * w_itemsize   # block-diag kron incl. zeros

    if packed_w1_bytes(base) > _PACKED_W1_BYTES_LIMIT:
        return 1   # large in_dim: packing would inflate weight DMA / VMEM / MXU work

    pack = base
    # Bonus: also make kin a 128-lane multiple (and nout up to 256 to match the
    # 256-wide MXU on v6e/v7x) while the packed weight stays within the guard.
    cand = base
    while (cand * in_dim) % _LANES != 0 and cand * out_dim < 2 * _LANES:
        cand *= 2
    if (cand * in_dim) % _LANES == 0 and packed_w1_bytes(cand) <= _PACKED_W1_BYTES_LIMIT:
        pack = cand

    # Ragged token counts: shrink pack so it divides m_total exactly; this is
    # what lets the wrapper drop jnp.pad / output slicing entirely.
    pack = math.gcd(pack, max(m_total, 1))
    return max(pack, 1)


def _gelu_exact(x):
    # PyTorch nn.GELU() default = exact erf formulation (parity with the module).
    return 0.5 * x * (1.0 + lax.erf(x * (1.0 / math.sqrt(2.0))))


def _updown_kernel(x_ref, w1_ref, b1_ref, w2_ref, b2_ref, o_ref):
    x = x_ref[...]
    if x.dtype != w1_ref.dtype:
        x = x.astype(w1_ref.dtype)        # avoid a mixed-dtype MXU op
    # Linear 1: (TM, K) @ (K, N) + (1, N), f32 accumulation on the MXU.
    h = jnp.dot(x, w1_ref[...], preferred_element_type=jnp.float32)
    h = h + b1_ref[...].astype(jnp.float32)
    h = _gelu_exact(h)
    # Linear 2: (TM, N) @ (N, N) + (1, N).
    o = jnp.dot(h.astype(w2_ref.dtype), w2_ref[...],
                preferred_element_type=jnp.float32)
    o = o + b2_ref[...].astype(jnp.float32)
    o_ref[...] = o.astype(o_ref.dtype)


@functools.partial(jax.jit, static_argnames=("block_m",))
def updown_sampling_layer(x, w1, b1, w2, b2, *, block_m=1024):
    """Linear(in,out) -> GELU -> Linear(out,out) applied to the last dim of x.

    w1: (in, out), w2: (out, out)  (transposed vs. torch.nn.Linear.weight)
    b1, b2: (out,)
    block_m: token-tile size in rows of the (possibly lane-packed) 2-D array.
    """
    in_dim = x.shape[-1]
    out_dim = w1.shape[1]
    lead_shape = x.shape[:-1]
    m_total = int(math.prod(lead_shape))
    if m_total == 0:
        return jnp.zeros((*lead_shape, out_dim), dtype=x.dtype)

    x_itemsize = jnp.dtype(x.dtype).itemsize
    w_itemsize = jnp.dtype(w1.dtype).itemsize

    # ---- lane-dense packing (guarded, and chosen to divide m_total exactly).
    pack = _choose_pack(m_total, in_dim, out_dim, w_itemsize)
    kin = pack * in_dim
    nout = pack * out_dim
    mp = m_total // pack                       # packed rows, no padding needed

    if pack > 1:
        # Block-diagonal weights: the packed result is a pure row-major
        # reinterpretation of the unpacked one (GELU is elementwise, rows are
        # independent), so this is exact.  The kron stays tiny by construction
        # (<= _PACKED_W1_BYTES_LIMIT), so building it in-jit costs negligible
        # HBM traffic.
        w1p = jnp.kron(jnp.eye(pack, dtype=w1.dtype), w1)   # (kin, nout)
        w2p = jnp.kron(jnp.eye(pack, dtype=w2.dtype), w2)   # (nout, nout)
        b1p = jnp.tile(b1, pack)
        b2p = jnp.tile(b2, pack)
    else:
        w1p, w2p, b1p, b2p = w1, w2, b1, b2
    b1_row = b1p.reshape(1, nout)
    b2_row = b2p.reshape(1, nout)

    x2p = x.reshape(mp, kin)                   # pack | m_total -> no pad copy

    # ---- resident weight footprint (lane-padded, x2 for default pipelining).
    w_vmem = (_vmem_array_bytes(kin, nout, w1.dtype)
              + _vmem_array_bytes(nout, nout, w2.dtype)
              + _vmem_array_bytes(1, nout, b1.dtype)
              + _vmem_array_bytes(1, nout, b2.dtype))
    resident_w = 2 * w_vmem   # TODO(synk): pl.Buffered(1) would make this 1x.

    # ---- generation-aware tile selection.
    sub = _sublanes(x.dtype)
    cap = _vmem_capacity_bytes()
    # ~50 MiB scoped budget on v7x (64 MiB/TC), ~100 MiB on v5e/v6e (128 MiB),
    # leaving headroom for compiler-internal scratch and semaphores.
    budget = int(cap * 0.78)

    tm = max(sub, min(int(block_m), _round_up(mp, sub)))
    tm = _round_up(tm, sub)

    def _footprint(t):
        # double-buffered x/out tiles (lane-padded) + resident weights/biases
        return (2 * (_vmem_array_bytes(t, kin, x.dtype)
                     + _vmem_array_bytes(t, nout, x.dtype))
                + resident_w)

    while tm > sub and _footprint(tm) > budget:
        tm = _round_up(max(sub, tm // 2), sub)

    grid_m = pl.cdiv(mp, tm)                   # partial last block handled by Pallas
    vmem_limit = int(min(budget, max(32 * _MIB, int(1.25 * _footprint(tm)))))

    cost = pl.CostEstimate(
        flops=2 * mp * (kin * nout + nout * nout),
        transcendentals=mp * nout,
        bytes_accessed=(mp * (kin + nout) * x_itemsize
                        + (kin * nout + nout * nout + 2 * nout) * w_itemsize),
    )

    out2p = pl.pallas_call(
        _updown_kernel,
        out_shape=jax.ShapeDtypeStruct((mp, nout), x.dtype),
        grid=(grid_m,),
        in_specs=[
            pl.BlockSpec((tm, kin), lambda i: (i, 0)),      # x tile (pipelined)
            pl.BlockSpec((kin, nout), lambda i: (0, 0)),    # w1 (VMEM-resident)
            pl.BlockSpec((1, nout), lambda i: (0, 0)),      # b1
            pl.BlockSpec((nout, nout), lambda i: (0, 0)),   # w2 (VMEM-resident)
            pl.BlockSpec((1, nout), lambda i: (0, 0)),      # b2
        ],
        out_specs=pl.BlockSpec((tm, nout), lambda i: (i, 0)),
        compiler_params=pltpu.CompilerParams(
            dimension_semantics=("parallel",),              # megacore sharding
            vmem_limit_bytes=vmem_limit),
        cost_estimate=cost,
    )(x2p, w1p, b1_row, w2p, b2_row)

    # Row-major reinterpretation back to (..., out_dim); no slicing needed.
    return out2p.reshape(*lead_shape, out_dim)


if __name__ == "__main__":
    # Small shapes consistent with the module: x of shape (batch, seq, input_dim).
    batch, seq = 2, 8
    input_dim, output_dim = 32, 64

    key = jax.random.PRNGKey(0)
    kx, kw1, kb1, kw2, kb2 = jax.random.split(key, 5)

    x = jax.random.normal(kx, (batch, seq, input_dim), dtype=jnp.float32)

    # Deterministic parameter init (nn.Linear shapes, stored transposed as (in,out)).
    scale1 = 1.0 / math.sqrt(input_dim)
    scale2 = 1.0 / math.sqrt(output_dim)
    w1 = jax.random.uniform(kw1, (input_dim, output_dim), jnp.float32, -scale1, scale1)
    b1 = jax.random.uniform(kb1, (output_dim,), jnp.float32, -scale1, scale1)
    w2 = jax.random.uniform(kw2, (output_dim, output_dim), jnp.float32, -scale2, scale2)
    b2 = jax.random.uniform(kb2, (output_dim,), jnp.float32, -scale2, scale2)

    def _reference(xx):
        h = xx @ w1 + b1
        h = 0.5 * h * (1.0 + lax.erf(h / jnp.sqrt(jnp.float32(2.0))))
        return h @ w2 + b2

    out = jax.block_until_ready(updown_sampling_layer(x, w1, b1, w2, b2))
    ref = _reference(x.reshape(-1, input_dim)).reshape(batch, seq, output_dim)
    assert out.shape == (batch, seq, output_dim)
    assert jnp.allclose(out, ref, atol=2e-5, rtol=2e-5), "mismatch vs reference"

    # Ragged token counts, handled with NO wrapper pad / slice:
    #  - 14 tokens: pack drops 4 -> 2 (still 128-lane stores), partial last block.
    x14 = x[:, :7, :]
    out14 = jax.block_until_ready(updown_sampling_layer(x14, w1, b1, w2, b2))
    ref14 = _reference(x14.reshape(-1, input_dim)).reshape(batch, 7, output_dim)
    assert jnp.allclose(out14, ref14, atol=2e-5, rtol=2e-5), "mismatch (ragged, pack=2)"

    #  - 7 tokens (odd): pack falls back to 1 (masked final stores), still exact.
    x7 = x[:1, :7, :]
    out7 = jax.block_until_ready(updown_sampling_layer(x7, w1, b1, w2, b2))
    ref7 = _reference(x7.reshape(-1, input_dim)).reshape(1, 7, output_dim)
    assert jnp.allclose(out7, ref7, atol=2e-5, rtol=2e-5), "mismatch (ragged, pack=1)"

    print("KERNEL_OK")
</pallas_src>

<mosaic_0001>
module attributes {stable_mosaic.version = 11 : i64} {
  func.func @_updown_kernel(%arg0: i32, %arg1: memref<8x128xf32, #tpu.memory_space<vmem>>, %arg2: memref<128x256xf32, #tpu.memory_space<vmem>>, %arg3: memref<1x256xf32, #tpu.memory_space<vmem>>, %arg4: memref<256x256xf32, #tpu.memory_space<vmem>>, %arg5: memref<1x256xf32, #tpu.memory_space<vmem>>, %arg6: memref<8x256xf32, #tpu.memory_space<vmem>>) attributes {dimension_semantics = [#tpu.dimension_semantics<parallel>], iteration_bounds = array<i64: 1>, scalar_prefetch = 0 : i64, scratch_operands = 0 : i64, tpu.core_type = #tpu.core_type<tc>, window_params = [{transform_indices = @transform_0, window_bounds = array<i64: 8, 128>}, {pipeline_mode = #tpu.pipeline_mode<synchronous>, transform_indices = @transform_1, window_bounds = array<i64: 128, 256>}, {pipeline_mode = #tpu.pipeline_mode<synchronous>, transform_indices = @transform_2, window_bounds = array<i64: 1, 256>}, {pipeline_mode = #tpu.pipeline_mode<synchronous>, transform_indices = @transform_3, window_bounds = array<i64: 256, 256>}, {pipeline_mode = #tpu.pipeline_mode<synchronous>, transform_indices = @transform_4, window_bounds = array<i64: 1, 256>}, {transform_indices = @transform_5, window_bounds = array<i64: 8, 256>}]} {
    %c0 = arith.constant 0 : index
    %c0_0 = arith.constant 0 : index
    %0 = vector.load %arg1[%c0, %c0_0] : memref<8x128xf32, #tpu.memory_space<vmem>>, vector<8x128xf32>
    %c0_1 = arith.constant 0 : index
    %c0_2 = arith.constant 0 : index
    %1 = vector.load %arg2[%c0_1, %c0_2] : memref<128x256xf32, #tpu.memory_space<vmem>>, vector<128x256xf32>
    %cst = arith.constant dense<0.000000e+00> : vector<8x256xf32>
    %2 = tpu.matmul %0, %1, %cst {dimension_numbers = #tpu.dot_dimension_numbers<[1], [0], [0], [1], [0, 0, 1, 1], [], []>} : vector<8x128xf32>, vector<128x256xf32>, vector<8x256xf32> -> vector<8x256xf32>
    %c0_3 = arith.constant 0 : index
    %c0_4 = arith.constant 0 : index
    %3 = vector.load %arg3[%c0_3, %c0_4] : memref<1x256xf32, #tpu.memory_space<vmem>>, vector<1x256xf32>
    %4 = vector.broadcast %3 : vector<1x256xf32> to vector<8x256xf32>
    %5 = arith.addf %2, %4 : vector<8x256xf32>
    %cst_5 = arith.constant 5.000000e-01 : f32
    %6 = vector.broadcast %cst_5 : f32 to vector<8x256xf32>
    %7 = arith.mulf %6, %5 : vector<8x256xf32>
    %cst_6 = arith.constant 0.707106769 : f32
    %8 = vector.broadcast %cst_6 : f32 to vector<8x256xf32>
    %9 = arith.mulf %5, %8 : vector<8x256xf32>
    %10 = math.erf %9 : vector<8x256xf32>
    %cst_7 = arith.constant 1.000000e+00 : f32
    %11 = vector.broadcast %cst_7 : f32 to vector<8x256xf32>
    %12 = arith.addf %11, %10 : vector<8x256xf32>
    %13 = arith.mulf %7, %12 : vector<8x256xf32>
    %c0_8 = arith.constant 0 : index
    %c0_9 = arith.constant 0 : index
    %14 = vector.load %arg4[%c0_8, %c0_9] : memref<256x256xf32, #tpu.memory_space<vmem>>, vector<256x256xf32>
    %cst_10 = arith.constant dense<0.000000e+00> : vector<8x256xf32>
    %15 = tpu.matmul %13, %14, %cst_10 {dimension_numbers = #tpu.dot_dimension_numbers<[1], [0], [0], [1], [0, 0, 1, 1], [], []>} : vector<8x256xf32>, vector<256x256xf32>, vector<8x256xf32> -> vector<8x256xf32>
    %c0_11 = arith.constant 0 : index
    %c0_12 = arith.constant 0 : index
    %16 = vector.load %arg5[%c0_11, %c0_12] : memref<1x256xf32, #tpu.memory_space<vmem>>, vector<1x256xf32>
    %17 = vector.broadcast %16 : vector<1x256xf32> to vector<8x256xf32>
    %18 = arith.addf %15, %17 : vector<8x256xf32>
    %c0_13 = arith.constant 0 : index
    %c0_14 = arith.constant 0 : index
    %19 = vector.load %arg6[%c0_13, %c0_14] : memref<8x256xf32, #tpu.memory_space<vmem>>, vector<8x256xf32>
    tpu.vector_store %arg6[%c0_13, %c0_14], %18 {strides = array<i32>} : memref<8x256xf32, #tpu.memory_space<vmem>>, vector<8x256xf32>,
    return
  }
  func.func @transform_0(%arg0: i32) -> (i32, i32) {
    %c0_i32 = arith.constant 0 : i32
    %c0_i32_0 = arith.constant 0 : i32
    return %arg0, %c0_i32 : i32, i32
  }
  func.func @transform_1(%arg0: i32) -> (i32, i32) {
    %c0_i32 = arith.constant 0 : i32
    %c0_i32_0 = arith.constant 0 : i32
    %c0_i32_1 = arith.constant 0 : i32
    return %c0_i32, %c0_i32_0 : i32, i32
  }
  func.func @transform_2(%arg0: i32) -> (i32, i32) {
    %c0_i32 = arith.constant 0 : i32
    %c0_i32_0 = arith.constant 0 : i32
    %c0_i32_1 = arith.constant 0 : i32
    return %c0_i32, %c0_i32_0 : i32, i32
  }
  func.func @transform_3(%arg0: i32) -> (i32, i32) {
    %c0_i32 = arith.constant 0 : i32
    %c0_i32_0 = arith.constant 0 : i32
    %c0_i32_1 = arith.constant 0 : i32
    return %c0_i32, %c0_i32_0 : i32, i32
  }
  func.func @transform_4(%arg0: i32) -> (i32, i32) {
    %c0_i32 = arith.constant 0 : i32
    %c0_i32_0 = arith.constant 0 : i32
    %c0_i32_1 = arith.constant 0 : i32
    return %c0_i32, %c0_i32_0 : i32, i32
  }
  func.func @transform_5(%arg0: i32) -> (i32, i32) {
    %c0_i32 = arith.constant 0 : i32
    %c0_i32_0 = arith.constant 0 : i32
    return %arg0, %c0_i32 : i32, i32
  }
}

</mosaic_0001>

<llo_original>
// kernel: tile.13
$region0: #{tile.13}
  #allocation0 [shape = 's32[1]{0}', space=sflag, size = 0x4, scoped, tag = 'scoped memory for tile.13']
  %s0 = inlined_call_operand.vmem [shape: f32[64], index: 0, kind: input, shape index: {}]
  %s1 = inlined_call_operand.vmem [shape: f32[4,64], index: 1, kind: output, shape index: {}]
  // Predicated region
  $region2: #{tile.13} parent=0 // pred_check
    _
  $region3: #{tile.13} parent=0 // pred_check_branch
    %3 = sbr.rel (0) target = $region5
  $region4: #{tile.13} parent=0 // pred_region
    _
  $region5: #{tile.13} parent=0 // pred_fallthru
    _
  %v4 = vld [vmem:[%s0] ss:$0 sm:$0xff]
  %5 = vst [vmem:[%s1] sm:$0xf] %v4

// kernel: tile.18
$region0: #{tile.18}
  %s0 = inlined_call_operand.vmem [shape: f32[4,64], index: 0, kind: input, shape index: {}]
  %s1 = inlined_call_operand.vmem [shape: f32[1,256], index: 1, kind: output, shape index: {}]
  $region1: #{tile.18} parent=0
    #allocation0 [shape = 'u8[8192]{0}', space=vmem, size = 0x2000, scoped, tag = 'scoped mem for output reshape']
    #allocation1 [shape = 'u8[4096]{0}', space=vmem, size = 0x1000, scoped, tag = 'scoped mem for input reshape']
    %s3 = sshll.u32 1, 4
    %s4 = ssub.s32 %s3, 1
    %v5 = vld [vmem:[%s0] sm:%s4]
    %6 = vst [vmem:[#allocation1] sm:%s4] %v5
    %s7 = smov 3
    %v8 = vld [vmem:[#allocation1] ss:$2 sm:%s7]
    %vm9 = vcmask 523264
    %10 = vst.msk [vmem:[#allocation0] ss:$8 sm:$0x3] %vm9, %v8
    %s11 = scalar_lea.vmem [#allocation1], 1
    %s12 = smov 3
    %v13 = vld [vmem:[%s11] ss:$2 sm:%s12]
    %14 = vrot.lane.b32.xlu0 %v13, 64
    %v15 = vpop.permute.xlu0 %14
    %vm16 = vcmask 1048064
    %17 = vst.msk [vmem:[#allocation0] ss:$8 sm:$0x3] %vm16, %v15
    %s19 = sshll.u32 1, 1
    %s20 = ssub.s32 %s19, 1
    %v22 = vld [vmem:[#allocation0] sm:%s20]
    %s23 = sshll.u32 1, 1
    %s24 = ssub.s32 %s23, 1
    %25 = vst [vmem:[%s1] sm:%s24] %v22
    %s26 = scalar_lea.vmem [#allocation0], 8
    %v27 = vld [vmem:[%s26] sm:%s20]
    %s28 = sshll.u32 1, 1
    %s29 = ssub.s32 %s28, 1
    %s30 = scalar_lea.vmem %s1, 1
    %31 = vst [vmem:[%s30] sm:%s29] %v27

// kernel: updown_sampling_layer.1
$region0: #{updown_sampling_layer.1}
  #allocation0 [shape = 'u32[]', space=smem, size = 0x4, offset = 0x4, fixed_abs, tag = 'smem constant byte address 0x4 - core index']
  #allocation1 [shape = 'u32[144,128]{1,0:T(1,128)}', space=vmem, size = 0x12000, scoped, tag = 'internal scratch']
  %s0 = inlined_call_operand.vmem [shape: f32[4,128], index: 0, kind: input, shape index: {}]
  %s1 = inlined_call_operand.vmem [shape: f32[128,256], index: 1, kind: input, shape index: {}]
  %s2 = inlined_call_operand.vmem [shape: f32[1,256], index: 2, kind: input, shape index: {}]
  %s3 = inlined_call_operand.vmem [shape: f32[256,256], index: 3, kind: input, shape index: {}]
  %s4 = inlined_call_operand.vmem [shape: f32[1,256], index: 4, kind: input, shape index: {}]
  %s5 = inlined_call_operand.vmem [shape: f32[4,256], index: 5, kind: output, shape index: {}]
  %s6 = sld [smem:[#allocation0]]
  $region64: #{updown_sampling_layer.1} parent=0
    _
  %s8 = ssub.s32 1, %s6
  %s9 = scalar_select 0, %s8, %s6
  $region1: #{updown_sampling_layer.1} parent=0
    #allocation2 [shape = 'u8[8192]{0}', space=vmem, size = 0x2000, scoped, tag = 'output window, operand 0, single buffered']
    // Predicated region
    $region2: #{updown_sampling_layer.1} parent=1 // pred_check
      _
    $region3: #{updown_sampling_layer.1} parent=1 // pred_check_branch
      %11 = sbr.rel (0) target = $region5
    $region4: #{updown_sampling_layer.1} parent=1 // pred_region
      _
    $region5: #{updown_sampling_layer.1} parent=1 // pred_fallthru
      _
    // Predicated region
    $region6: #{updown_sampling_layer.1} parent=1 // pred_check
      _
    $region7: #{updown_sampling_layer.1} parent=1 // pred_check_branch
      %13 = sbr.rel (0) target = $region9
    $region8: #{updown_sampling_layer.1} parent=1 // pred_region
      _
    $region9: #{updown_sampling_layer.1} parent=1 // pred_fallthru
      _
    // Predicated region
    $region10: #{updown_sampling_layer.1} parent=1 // pred_check
      _
    $region11: #{updown_sampling_layer.1} parent=1 // pred_check_branch
      %15 = sbr.rel (0) target = $region13
    $region12: #{updown_sampling_layer.1} parent=1 // pred_region
      _
    $region13: #{updown_sampling_layer.1} parent=1 // pred_fallthru
      _
    // Predicated region
    $region14: #{updown_sampling_layer.1} parent=1 // pred_check
      _
    $region15: #{updown_sampling_layer.1} parent=1 // pred_check_branch
      %17 = sbr.rel (0) target = $region17
    $region16: #{updown_sampling_layer.1} parent=1 // pred_region
      _
    $region17: #{updown_sampling_layer.1} parent=1 // pred_fallthru
      _
    // Predicated region
    $region18: #{updown_sampling_layer.1} parent=1 // pred_check
      _
    $region19: #{updown_sampling_layer.1} parent=1 // pred_check_branch
      %19 = sbr.rel (0) target = $region21
    $region20: #{updown_sampling_layer.1} parent=1 // pred_region
      _
    $region21: #{updown_sampling_layer.1} parent=1 // pred_fallthru
      _
    %v20 = vld [vmem:[%s0] sm:$0xff]
    %v21 = vld [vmem:[%s1] sm:$0xff]
    %v22 = vld [vmem:[%s1 + $0x8] sm:$0xff]
    %v23 = vld [vmem:[%s1 + $0x10] sm:$0xff]
    %v24 = vld [vmem:[%s1 + $0x18] sm:$0xff]
    %v25 = vld [vmem:[%s1 + $0x20] sm:$0xff]
    %v26 = vld [vmem:[%s1 + $0x28] sm:$0xff]
    %v27 = vld [vmem:[%s1 + $0x30] sm:$0xff]
    %v28 = vld [vmem:[%s1 + $0x38] sm:$0xff]
    %v29 = vld [vmem:[%s1 + $0x40] sm:$0xff]
    %v30 = vld [vmem:[%s1 + $0x48] sm:$0xff]
    %v31 = vld [vmem:[%s1 + $0x50] sm:$0xff]
    %v32 = vld [vmem:[%s1 + $0x58] sm:$0xff]
    %v33 = vld [vmem:[%s1 + $0x60] sm:$0xff]
    %v34 = vld [vmem:[%s1 + $0x68] sm:$0xff]
    %v35 = vld [vmem:[%s1 + $0x70] sm:$0xff]
    %v36 = vld [vmem:[%s1 + $0x78] sm:$0xff]
    %v37 = vld [vmem:[%s1 + $0x80] sm:$0xff]
    %v38 = vld [vmem:[%s1 + $0x88] sm:$0xff]
    %v39 = vld [vmem:[%s1 + $0x90] sm:$0xff]
    %v40 = vld [vmem:[%s1 + $0x98] sm:$0xff]
    %v41 = vld [vmem:[%s1 + $0xa0] sm:$0xff]
    %v42 = vld [vmem:[%s1 + $0xa8] sm:$0xff]
    %v43 = vld [vmem:[%s1 + $0xb0] sm:$0xff]
    %v44 = vld [vmem:[%s1 + $0xb8] sm:$0xff]
    %v45 = vld [vmem:[%s1 + $0xc0] sm:$0xff]
    %v46 = vld [vmem:[%s1 + $0xc8] sm:$0xff]
    %v47 = vld [vmem:[%s1 + $0xd0] sm:$0xff]
    %v48 = vld [vmem:[%s1 + $0xd8] sm:$0xff]
    %v49 = vld [vmem:[%s1 + $0xe0] sm:$0xff]
    %v50 = vld [vmem:[%s1 + $0xe8] sm:$0xff]
    %v51 = vld [vmem:[%s1 + $0xf0] sm:$0xff]
    %v52 = vld [vmem:[%s1 + $0xf8] sm:$0xff]
    %v53 = vld [vmem:[%s2] sm:$0x3]
    %v55 = vlaneseq
    %v56 = vshrl.u32 %v55, 7
    %v57 = vsub.s32 0, %v56
    %v58 = vrot.slane %v53, %v57
    %v59 = vlaneseq
    %v60 = vshrl.u32 %v59, 7
    %v61 = vsub.s32 1, %v60
    %v62 = vrot.slane %v53, %v61
    %65 = vmatprep.subr.mxu0 %v52
    %66 = vmatpush1.msra.mxu0 %v51
    %67 = vmatprep.subr.mxu0 %v50
    %68 = vmatpush1.msra.mxu0 %v49
    %69 = vmatprep.subr.mxu0 %v48
    %70 = vmatpush1.msra.mxu0 %v47
    %71 = vmatprep.subr.mxu0 %v46
    %72 = vmatpush1.msra.mxu0 %v45
    %73 = vmatprep.subr.mxu0 %v44
    %74 = vmatpush1.msra.mxu0 %v43
    %75 = vmatprep.subr.mxu0 %v42
    %76 = vmatpush1.msra.mxu0 %v41
    %77 = vmatprep.subr.mxu0 %v40
    %78 = vmatpush1.msra.mxu0 %v39
    %79 = vmatprep.subr.mxu0 %v38
    %80 = vmatpush1.msra.mxu0 %v37
    %81 = vmatprep.subr.mxu0 %v36
    %82 = vmatpush1.msra.mxu0 %v35
    %83 = vmatprep.subr.mxu0 %v34
    %84 = vmatpush1.msra.mxu0 %v33
    %85 = vmatprep.subr.mxu0 %v32
    %86 = vmatpush1.msra.mxu0 %v31
    %87 = vmatprep.subr.mxu0 %v30
    %88 = vmatpush1.msra.mxu0 %v29
    %89 = vmatprep.subr.mxu0 %v28
    %90 = vmatpush1.msra.mxu0 %v27
    %91 = vmatprep.subr.mxu0 %v26
    %92 = vmatpush1.msra.mxu0 %v25
    %93 = vmatprep.subr.mxu0 %v24
    %94 = vmatpush1.msra.mxu0 %v23
    %95 = vmatprep.subr.mxu0 %v22
    %96 = vmatpush1.msra.mxu0 %v21
    %97 = vmatprep.subr.mxu0 0.0
    %98 = vmatpush2.msra.mxu0 0.0
    %99 = vmatprep.subr.mxu0 0.0
    %100 = vmatpush2.msra.mxu0 0.0
    %101 = vmatprep.subr.mxu0 0.0
    %102 = vmatpush2.msra.mxu0 0.0
    %103 = vmatprep.subr.mxu0 0.0
    %104 = vmatpush2.msra.mxu0 0.0
    %105 = vmatprep.subr.mxu0 0.0
    %106 = vmatpush2.msra.mxu0 0.0
    %107 = vmatprep.subr.mxu0 0.0
    %108 = vmatpush2.msra.mxu0 0.0
    %109 = vmatprep.subr.mxu0 0.0
    %110 = vmatpush2.msra.mxu0 0.0
    %111 = vmatprep.subr.mxu0 0.0
    %112 = vmatpush2.msra.mxu0 0.0
    %113 = vmatprep.subr.mxu0 0.0
    %114 = vmatpush2.msra.mxu0 0.0
    %115 = vmatprep.subr.mxu0 0.0
    %116 = vmatpush2.msra.mxu0 0.0
    %117 = vmatprep.subr.mxu0 0.0
    %118 = vmatpush2.msra.mxu0 0.0
    %119 = vmatprep.subr.mxu0 0.0
    %120 = vmatpush2.msra.mxu0 0.0
    %121 = vmatprep.subr.mxu0 0.0
    %122 = vmatpush2.msra.mxu0 0.0
    %123 = vmatprep.subr.mxu0 0.0
    %124 = vmatpush2.msra.mxu0 0.0
    %125 = vmatprep.subr.mxu0 0.0
    %126 = vmatpush2.msra.mxu0 0.0
    %127 = vmatprep.subr.mxu0 0.0
    %128 = vmatpush2.msra.mxu0 0.0
    %129 = vmatprep.mubr.f32.mxu0 0.0
    %130 = vmatmul.mubr.f32.gmra.mxu0 %v20
    %v131 = vpop.f32.mrf.mxu0
    %v132 = vadd.f32 %v58, %v131
    %v133 = vpop.f32.mrf.mxu0
    %v134 = vadd.f32 %v62, %v133
    %135 = vdwg.mxu0
    %v136 = vmul.f32 %v132, 0.5
    %v137 = vmul.f32 %v134, 0.5
    %v138 = vmul.f32 %v132, 0.70710677
    %v139 = vmul.f32 %v134, 0.70710677
    %v140 = verf.f32.pop %v138
    %v141 = verf.f32.pop %v139
    %v142 = vadd.f32 %v140, 1.0
    %v143 = vadd.f32 %v141, 1.0
    %v144 = vmul.f32 %v136, %v142
    %v145 = vmul.f32 %v137, %v143
    %v146 = vld [vmem:[%s3] sm:$0xff]
    %v147 = vld [vmem:[%s3 + $0x8] sm:$0xff]
    %v148 = vld [vmem:[%s3 + $0x10] sm:$0xff]
    %v149 = vld [vmem:[%s3 + $0x18] sm:$0xff]
    %v150 = vld [vmem:[%s3 + $0x20] sm:$0xff]
    %v151 = vld [vmem:[%s3 + $0x28] sm:$0xff]
    %v152 = vld [vmem:[%s3 + $0x30] sm:$0xff]
    %v153 = vld [vmem:[%s3 + $0x38] sm:$0xff]
    %v154 = vld [vmem:[%s3 + $0x40] sm:$0xff]
    %v155 = vld [vmem:[%s3 + $0x48] sm:$0xff]
    %v156 = vld [vmem:[%s3 + $0x50] sm:$0xff]
    %v157 = vld [vmem:[%s3 + $0x58] sm:$0xff]
    %v158 = vld [vmem:[%s3 + $0x60] sm:$0xff]
    %v159 = vld [vmem:[%s3 + $0x68] sm:$0xff]
    %v160 = vld [vmem:[%s3 + $0x70] sm:$0xff]
    %v161 = vld [vmem:[%s3 + $0x78] sm:$0xff]
    %v162 = vld [vmem:[%s3 + $0x80] sm:$0xff]
    %v163 = vld [vmem:[%s3 + $0x88] sm:$0xff]
    %v164 = vld [vmem:[%s3 + $0x90] sm:$0xff]
    %v165 = vld [vmem:[%s3 + $0x98] sm:$0xff]
    %v166 = vld [vmem:[%s3 + $0xa0] sm:$0xff]
    %v167 = vld [vmem:[%s3 + $0xa8] sm:$0xff]
    %v168 = vld [vmem:[%s3 + $0xb0] sm:$0xff]
    %v169 = vld [vmem:[%s3 + $0xb8] sm:$0xff]
    %v170 = vld [vmem:[%s3 + $0xc0] sm:$0xff]
    %v171 = vld [vmem:[%s3 + $0xc8] sm:$0xff]
    %v172 = vld [vmem:[%s3 + $0xd0] sm:$0xff]
    %v173 = vld [vmem:[%s3 + $0xd8] sm:$0xff]
    %v174 = vld [vmem:[%s3 + $0xe0] sm:$0xff]
    %v175 = vld [vmem:[%s3 + $0xe8] sm:$0xff]
    %v176 = vld [vmem:[%s3 + $0xf0] sm:$0xff]
    %v177 = vld [vmem:[%s3 + $0xf8] sm:$0xff]
    %v178 = vld [vmem:[%s3 + $0x100] sm:$0xff]
    %v179 = vld [vmem:[%s3 + $0x108] sm:$0xff]
    %v180 = vld [vmem:[%s3 + $0x110] sm:$0xff]
    %v181 = vld [vmem:[%s3 + $0x118] sm:$0xff]
    %v182 = vld [vmem:[%s3 + $0x120] sm:$0xff]
    %v183 = vld [vmem:[%s3 + $0x128] sm:$0xff]
    %v184 = vld [vmem:[%s3 + $0x130] sm:$0xff]
    %v185 = vld [vmem:[%s3 + $0x138] sm:$0xff]
    %v186 = vld [vmem:[%s3 + $0x140] sm:$0xff]
    %v187 = vld [vmem:[%s3 + $0x148] sm:$0xff]
    %v188 = vld [vmem:[%s3 + $0x150] sm:$0xff]
    %v189 = vld [vmem:[%s3 + $0x158] sm:$0xff]
    %v190 = vld [vmem:[%s3 + $0x160] sm:$0xff]
    %v191 = vld [vmem:[%s3 + $0x168] sm:$0xff]
    %v192 = vld [vmem:[%s3 + $0x170] sm:$0xff]
    %v193 = vld [vmem:[%s3 + $0x178] sm:$0xff]
    %v194 = vld [vmem:[%s3 + $0x180] sm:$0xff]
    %v195 = vld [vmem:[%s3 + $0x188] sm:$0xff]
    %v196 = vld [vmem:[%s3 + $0x190] sm:$0xff]
    %v197 = vld [vmem:[%s3 + $0x198] sm:$0xff]
    %v198 = vld [vmem:[%s3 + $0x1a0] sm:$0xff]
    %v199 = vld [vmem:[%s3 + $0x1a8] sm:$0xff]
    %v200 = vld [vmem:[%s3 + $0x1b0] sm:$0xff]
    %v201 = vld [vmem:[%s3 + $0x1b8] sm:$0xff]
    %v202 = vld [vmem:[%s3 + $0x1c0] sm:$0xff]
    %v203 = vld [vmem:[%s3 + $0x1c8] sm:$0xff]
    %v204 = vld [vmem:[%s3 + $0x1d0] sm:$0xff]
    %v205 = vld [vmem:[%s3 + $0x1d8] sm:$0xff]
    %v206 = vld [vmem:[%s3 + $0x1e0] sm:$0xff]
    %v207 = vld [vmem:[%s3 + $0x1e8] sm:$0xff]
    %v208 = vld [vmem:[%s3 + $0x1f0] sm:$0xff]
    %v209 = vld [vmem:[%s3 + $0x1f8] sm:$0xff]
    %v210 = vld [vmem:[%s4] sm:$0x3]
    %v212 = vlaneseq
    %v213 = vshrl.u32 %v212, 7
    %v214 = vsub.s32 0, %v213
    %v215 = vrot.slane %v210, %v214
    %v216 = vlaneseq
    %v217 = vshrl.u32 %v216, 7
    %v218 = vsub.s32 1, %v217
    %v219 = vrot.slane %v210, %v218
    %222 = vmatprep.subr.mxu0 %v177
    %223 = vmatpush1.msra.mxu0 %v176
    %224 = vmatprep.subr.mxu0 %v175
    %225 = vmatpush1.msra.mxu0 %v174
    %226 = vmatprep.subr.mxu0 %v173
    %227 = vmatpush1.msra.mxu0 %v172
    %228 = vmatprep.subr.mxu0 %v171
    %229 = vmatpush1.msra.mxu0 %v170
    %230 = vmatprep.subr.mxu0 %v169
    %231 = vmatpush1.msra.mxu0 %v168
    %232 = vmatprep.subr.mxu0 %v167
    %233 = vmatpush1.msra.mxu0 %v166
    %234 = vmatprep.subr.mxu0 %v165
    %235 = vmatpush1.msra.mxu0 %v164
    %236 = vmatprep.subr.mxu0 %v163
    %237 = vmatpush1.msra.mxu0 %v162
    %238 = vmatprep.subr.mxu0 %v161
    %239 = vmatpush1.msra.mxu0 %v160
    %240 = vmatprep.subr.mxu0 %v159
    %241 = vmatpush1.msra.mxu0 %v158
    %242 = vmatprep.subr.mxu0 %v157
    %243 = vmatpush1.msra.mxu0 %v156
    %244 = vmatprep.subr.mxu0 %v155
    %245 = vmatpush1.msra.mxu0 %v154
    %246 = vmatprep.subr.mxu0 %v153
    %247 = vmatpush1.msra.mxu0 %v152
    %248 = vmatprep.subr.mxu0 %v151
    %249 = vmatpush1.msra.mxu0 %v150
    %250 = vmatprep.subr.mxu0 %v149
    %251 = vmatpush1.msra.mxu0 %v148
    %252 = vmatprep.subr.mxu0 %v147
    %253 = vmatpush1.msra.mxu0 %v146
    %254 = vmatprep.subr.mxu0 %v209
    %255 = vmatpush2.msra.mxu0 %v208
    %256 = vmatprep.subr.mxu0 %v207
    %257 = vmatpush2.msra.mxu0 %v206
    %258 = vmatprep.subr.mxu0 %v205
    %259 = vmatpush2.msra.mxu0 %v204
    %260 = vmatprep.subr.mxu0 %v203
    %261 = vmatpush2.msra.mxu0 %v202
    %262 = vmatprep.subr.mxu0 %v201
    %263 = vmatpush2.msra.mxu0 %v200
    %264 = vmatprep.subr.mxu0 %v199
    %265 = vmatpush2.msra.mxu0 %v198
    %266 = vmatprep.subr.mxu0 %v197
    %267 = vmatpush2.msra.mxu0 %v196
    %268 = vmatprep.subr.mxu0 %v195
    %269 = vmatpush2.msra.mxu0 %v194
    %270 = vmatprep.subr.mxu0 %v193
    %271 = vmatpush2.msra.mxu0 %v192
    %272 = vmatprep.subr.mxu0 %v191
    %273 = vmatpush2.msra.mxu0 %v190
    %274 = vmatprep.subr.mxu0 %v189
    %275 = vmatpush2.msra.mxu0 %v188
    %276 = vmatprep.subr.mxu0 %v187
    %277 = vmatpush2.msra.mxu0 %v186
    %278 = vmatprep.subr.mxu0 %v185
    %279 = vmatpush2.msra.mxu0 %v184
    %280 = vmatprep.subr.mxu0 %v183
    %281 = vmatpush2.msra.mxu0 %v182
    %282 = vmatprep.subr.mxu0 %v181
    %283 = vmatpush2.msra.mxu0 %v180
    %284 = vmatprep.subr.mxu0 %v179
    %285 = vmatpush2.msra.mxu0 %v178
    %286 = vmatprep.mubr.f32.mxu0 %v145
    %287 = vmatmul.mubr.f32.gmra.mxu0 %v144
    %v288 = vpop.f32.mrf.mxu0
    %v289 = vadd.f32 %v215, %v288
    %v290 = vpop.f32.mrf.mxu0
    %v291 = vadd.f32 %v219, %v290
    %292 = vdwg.mxu0
    %v295 = vcombine.low %v289, %v291
    %v296 = vcombine.high %v289, %v291
    %299 = vst [vmem:[#allocation2] sm:$0xff] %v295
    %300 = vst [vmem:[#allocation2 + $0x8] sm:$0xff] %v296
    // Predicated region
    $region22: #{updown_sampling_layer.1} parent=1 // pred_check
      _
    $region23: #{updown_sampling_layer.1} parent=1 // pred_check_branch
      %302 = sbr.rel (0) target = $region25
    $region24: #{updown_sampling_layer.1} parent=1 // pred_region
      // Predicated region
      $region26: #{updown_sampling_layer.1} parent=24 // pred_check
        _
      $region27: #{updown_sampling_layer.1} parent=24 // pred_check_branch
        %304 = sbr.rel (0) target = $region29
      $region28: #{updown_sampling_layer.1} parent=24 // pred_region
        // Predicated region
        $region30: #{updown_sampling_layer.1} parent=28 // pred_check
          _
        $region31: #{updown_sampling_layer.1} parent=28 // pred_check_branch
          %306 = sbr.rel (0) target = $region33
        $region32: #{updown_sampling_layer.1} parent=28 // pred_region
          // Predicated region
          $region45: #{updown_sampling_layer.1} parent=32 // pred_check
            _
          $region46: #{updown_sampling_layer.1} parent=32 // pred_check_branch
            %322 = sbr.rel (0) target = $region48
          $region47: #{updown_sampling_layer.1} parent=32 // pred_region
            loop: start=0, step=1, limit=1
            $region49: #{updown_sampling_layer.1} parent=47 // loop_pre_header
              _
            $region50: #{updown_sampling_layer.1} parent=47 // loop_header
              %s324 = sphi 0, %s328
              %p325 = scmp.ge.s32.totalorder %s324, 1
              %s329 = sphi [#allocation2], [#allocation2]
              %s330 = sphi %s5, %s5
            $region51: #{updown_sampling_layer.1} parent=47 // loop_header_branch
              %327 = sbr.rel (%p325) target = $region55
            $region52: #{updown_sampling_layer.1} parent=47 // loop_body
              %v331 = vld [vmem:[%s329] sm:$0xff]
              %332 = vst [vmem:[%s330] sm:$0xff] %v331
            $region53: #{updown_sampling_layer.1} parent=47 // loop_footer
              %s328 = sadd.s32 1, %s324
            $region54: #{updown_sampling_layer.1} parent=47 // loop_footer_branch
              %323 = sbr.rel target = $region50
            $region55: #{updown_sampling_layer.1} parent=47 // loop_exit
              _
          $region48: #{updown_sampling_layer.1} parent=32 // pred_fallthru
            _
          // Predicated region
          $region56: #{updown_sampling_layer.1} parent=32 // pred_check
            _
          $region57: #{updown_sampling_layer.1} parent=32 // pred_check_branch
            %334 = sbr.rel target = $region59
          $region58: #{updown_sampling_layer.1} parent=32 // pred_region
            _
          $region59: #{updown_sampling_layer.1} parent=32 // pred_fallthru
            _
        $region33: #{updown_sampling_layer.1} parent=28 // pred_fallthru
          _
        // Predicated region
        $region34: #{updown_sampling_layer.1} parent=28 // pred_check
          _
        $region35: #{updown_sampling_layer.1} parent=28 // pred_check_branch
          %308 = sbr.rel target = $region37
        $region36: #{updown_sampling_layer.1} parent=28 // pred_region
          %s310 = ssub.s32 256, 1
          loop: start=0, step=1, limit=1
          $region38: #{updown_sampling_layer.1} parent=36 // loop_pre_header
            _
          $region39: #{updown_sampling_layer.1} parent=36 // loop_header
            %s312 = sphi 0, %s316
            %p313 = scmp.ge.s32.totalorder %s312, 1
            %s317 = sphi [#allocation2], [#allocation2]
            %s318 = sphi %s5, %s5
          $region40: #{updown_sampling_layer.1} parent=36 // loop_header_branch
            %315 = sbr.rel (%p313) target = $region44
          $region41: #{updown_sampling_layer.1} parent=36 // loop_body
            %v319 = vld [vmem:[%s317] sm:%s310]
            %320 = vst [vmem:[%s318] sm:%s310] %v319
          $region42: #{updown_sampling_layer.1} parent=36 // loop_footer
            %s316 = sadd.s32 1, %s312
          $region43: #{updown_sampling_layer.1} parent=36 // loop_footer_branch
            %311 = sbr.rel target = $region39
          $region44: #{updown_sampling_layer.1} parent=36 // loop_exit
            _
        $region37: #{updown_sampling_layer.1} parent=28 // pred_fallthru
          _
      $region29: #{updown_sampling_layer.1} parent=24 // pred_fallthru
        _
      %335 = vnop
    $region25: #{updown_sampling_layer.1} parent=1 // pred_fallthru
      _
    // Predicated region
    $region60: #{updown_sampling_layer.1} parent=1 // pred_check
      _
    $region61: #{updown_sampling_layer.1} parent=1 // pred_check_branch
      %337 = sbr.rel (0) target = $region63
    $region62: #{updown_sampling_layer.1} parent=1 // pred_region
      _
    $region63: #{updown_sampling_layer.1} parent=1 // pred_fallthru
      _

</llo_original>
